<compile_context>
chip_gen: v7x
topology: tpu7x:2x2x1
jax: 0.10.0
libtpu: 0.0.40
codegen_flags: <defaults>
</compile_context>

<pallas_src>
import jax
import jax.numpy as jnp
from jax.experimental import pallas as pl
from jax.experimental.pallas import tpu as pltpu


LANES_WIDE = 512                      # preferred lane-dense slab width (multiple of 128)
LANES_MIN = 128                       # fallback width (still full-lane, unmasked stores)
TARGET_BLOCK_BYTES = 4 * 1024 * 1024  # ~4 MiB per array per block (v6e/v7x sweet spot)
VMEM_LIMIT_BYTES = 32 * 1024 * 1024   # 3 arrays x 2 buffers x 4 MiB = 24 MiB + headroom;
                                      # explicit so v5e's 16 MiB default doesn't block it.

# Dtypes streamed through the kernel natively (compute is always f32 in-register).
_NATIVE_STREAM_DTYPES = (
    jnp.dtype(jnp.float32),
    jnp.dtype(jnp.bfloat16),
    jnp.dtype(jnp.float16),
)


def _make_prox_l1_kernel(sigma: float):
    """Elementwise soft-threshold kernel with sigma baked in as a constant."""

    def kernel(x_ref, f_ref, o_ref):
        # Cast to f32 in-register: the kernel is DMA/HBM-bound, VALU slots have
        # huge slack, and this keeps the threshold bit-comparable to the f32
        # PyTorch reference even for bf16/f16 callers.
        x = x_ref[...].astype(jnp.float32)
        f = f_ref[...].astype(jnp.float32)
        d = x - f
        s = jnp.float32(sigma)
        # Soft-thresholding: identical to max(0, |d| - s) * sign(d) + f.
        o_ref[...] = (x - jnp.clip(d, -s, s)).astype(o_ref.dtype)

    return kernel


def _round_up(a: int, b: int) -> int:
    return ((a + b - 1) // b) * b


def prox_l1(xk: jax.Array, f: jax.Array, sigma: float = 1.0) -> jax.Array:
    """Pallas implementation of Prox_l1_f.forward (elementwise, any shape)."""
    assert xk.shape == f.shape, "xk and f must have the same shape"
    orig_shape = xk.shape
    orig_dtype = xk.dtype

    x_flat = xk.reshape(-1)
    f_flat = f.reshape(-1)
    n = x_flat.size
    if n == 0:
        return xk

    # Stream dtype: keep 16/32-bit floats native (halves HBM bytes for 16-bit
    # callers); everything else falls back to an f32 round-trip in the wrapper.
    if jnp.dtype(orig_dtype) in _NATIVE_STREAM_DTYPES:
        stream_dtype = jnp.dtype(orig_dtype)
    else:
        # TODO(synk): integer inputs take a float32 round-trip; PyTorch's exact
        # integer-promotion semantics are not reproduced.
        stream_dtype = jnp.dtype(jnp.float32)
        x_flat = x_flat.astype(stream_dtype)
        f_flat = f_flat.astype(stream_dtype)

    # Pick a lane-dense 2-D view WITHOUT copying when possible.
    padded = 0
    if n % LANES_WIDE == 0:
        cols = LANES_WIDE
    elif n % LANES_MIN == 0:
        cols = LANES_MIN
    else:
        # Rare ragged case (n not a multiple of 128): pad to a full 512-lane row.
        cols = LANES_WIDE
        padded = _round_up(n, cols) - n
        x_flat = jnp.pad(x_flat, (0, padded))
        f_flat = jnp.pad(f_flat, (0, padded))

    rows = (n + padded) // cols
    x2 = x_flat.reshape(rows, cols)
    f2 = f_flat.reshape(rows, cols)

    # Block rows: target ~TARGET_BLOCK_BYTES per array per block, dtype-aware,
    # rounded to the sublane packing multiple of the streamed dtype.
    itemsize = stream_dtype.itemsize
    pack = max(8, 32 // itemsize)  # f32 -> 8, bf16/f16 -> 16, 8-bit -> 32
    tile_rows = max(pack, (TARGET_BLOCK_BYTES // (cols * itemsize)) // pack * pack)

    if rows <= tile_rows:
        # Whole problem fits one block. Prefer >= 2 grid steps so both v7x
        # TensorCores get work; otherwise fall back to a single full-extent block.
        half = _round_up(pl.cdiv(rows, 2), pack)
        if half < rows:
            tile_rows = half
        else:
            tile_rows = rows  # block == full array extent (always legal)

    grid = (pl.cdiv(rows, tile_rows),)
    spec = pl.BlockSpec((tile_rows, cols), lambda i: (i, 0))

    out2 = pl.pallas_call(
        _make_prox_l1_kernel(float(sigma)),
        out_shape=jax.ShapeDtypeStruct((rows, cols), stream_dtype),
        grid=grid,
        in_specs=[spec, spec],
        out_specs=spec,
        compiler_params=pltpu.CompilerParams(
            dimension_semantics=("parallel",),
            vmem_limit_bytes=VMEM_LIMIT_BYTES,
        ),
    )(x2, f2)

    out = out2.reshape(-1)
    if padded:
        out = out[:n]
    out = out.reshape(orig_shape)
    if out.dtype != orig_dtype:
        out = out.astype(orig_dtype)
    return out


def prox_l1_reference(xk, f, sigma=1.0):
    d = xk - f
    return jnp.maximum(0.0, jnp.abs(d) - sigma) * jnp.sign(d) + f


if __name__ == "__main__":
    key = jax.random.PRNGKey(0)
    k1, k2 = jax.random.split(key)
    # Small NCHW shapes consistent with an image-denoising prox operator.
    B, C, H, W = 2, 4, 16, 16
    xk = jax.random.normal(k1, (B, C, H, W), dtype=jnp.float32) * 2.0
    f = jax.random.normal(k2, (B, C, H, W), dtype=jnp.float32)

    sigma = 1.0  # matches Prox_l1_f(sigma=1.0)

    out = prox_l1(xk, f, sigma=sigma)
    out = jax.block_until_ready(out)

    ref = prox_l1_reference(xk, f, sigma=sigma)
    assert out.shape == (B, C, H, W)
    assert out.dtype == xk.dtype
    assert jnp.allclose(out, ref, atol=1e-5, rtol=1e-5), "mismatch vs reference"

    print("KERNEL_OK")
</pallas_src>

<mosaic_0001>
module attributes {stable_mosaic.version = 11 : i64} {
  func.func @kernel(%arg0: i32, %arg1: memref<4x512xf32, #tpu.memory_space<vmem>>, %arg2: memref<4x512xf32, #tpu.memory_space<vmem>>, %arg3: memref<4x512xf32, #tpu.memory_space<vmem>>) attributes {dimension_semantics = [#tpu.dimension_semantics<parallel>], iteration_bounds = array<i64: 1>, scalar_prefetch = 0 : i64, scratch_operands = 0 : i64, tpu.core_type = #tpu.core_type<tc>, window_params = [{transform_indices = @transform_0, window_bounds = array<i64: 4, 512>}, {transform_indices = @transform_1, window_bounds = array<i64: 4, 512>}, {transform_indices = @transform_2, window_bounds = array<i64: 4, 512>}]} {
    %c0 = arith.constant 0 : index
    %c0_0 = arith.constant 0 : index
    %0 = vector.load %arg1[%c0, %c0_0] : memref<4x512xf32, #tpu.memory_space<vmem>>, vector<4x512xf32>
    %c0_1 = arith.constant 0 : index
    %c0_2 = arith.constant 0 : index
    %1 = vector.load %arg2[%c0_1, %c0_2] : memref<4x512xf32, #tpu.memory_space<vmem>>, vector<4x512xf32>
    %2 = arith.subf %0, %1 : vector<4x512xf32>
    %cst = arith.constant 0.000000e+00 : f32
    %cst_3 = arith.constant 1.000000e+00 : f32
    %3 = arith.subf %cst, %cst_3 : f32
    %cst_4 = arith.constant 1.000000e+00 : f32
    %4 = vector.broadcast %3 : f32 to vector<4x512xf32>
    %5 = arith.maximumf %4, %2 : vector<4x512xf32>
    %6 = vector.broadcast %cst_4 : f32 to vector<4x512xf32>
    %7 = arith.minimumf %6, %5 : vector<4x512xf32>
    %8 = arith.subf %0, %7 : vector<4x512xf32>
    %c0_5 = arith.constant 0 : index
    %c0_6 = arith.constant 0 : index
    %9 = vector.load %arg3[%c0_5, %c0_6] : memref<4x512xf32, #tpu.memory_space<vmem>>, vector<4x512xf32>
    tpu.vector_store %arg3[%c0_5, %c0_6], %8 {strides = array<i32>} : memref<4x512xf32, #tpu.memory_space<vmem>>, vector<4x512xf32>,
    return
  }
  func.func @transform_0(%arg0: i32) -> (i32, i32) {
    %c0_i32 = arith.constant 0 : i32
    %c0_i32_0 = arith.constant 0 : i32
    return %arg0, %c0_i32 : i32, i32
  }
  func.func @transform_1(%arg0: i32) -> (i32, i32) {
    %c0_i32 = arith.constant 0 : i32
    %c0_i32_0 = arith.constant 0 : i32
    return %arg0, %c0_i32 : i32, i32
  }
  func.func @transform_2(%arg0: i32) -> (i32, i32) {
    %c0_i32 = arith.constant 0 : i32
    %c0_i32_0 = arith.constant 0 : i32
    return %arg0, %c0_i32 : i32, i32
  }
}

</mosaic_0001>

<llo_original>
// kernel: tpu_custom_call.1
$region0: #{tpu_custom_call.1}
  #allocation0 [shape = 'u32[]', space=smem, size = 0x4, offset = 0x4, fixed_abs, tag = 'smem constant byte address 0x4 - core index']
  #allocation1 [shape = 'u32[144,128]{1,0:T(1,128)}', space=vmem, size = 0x12000, scoped, tag = 'internal scratch']
  %s0 = inlined_call_operand.hbm [shape: f32[4,512], index: 0, kind: input, shape index: {}]
  %s1 = inlined_call_operand.hbm [shape: f32[4,512], index: 1, kind: input, shape index: {}]
  %s2 = inlined_call_operand.hbm [shape: f32[4,512], index: 2, kind: output, shape index: {}]
  %s3 = sld [smem:[#allocation0]]
  $region26: #{tpu_custom_call.1} parent=0
    _
  %s5 = ssub.s32 1, %s3
  %s6 = scalar_select 0, %s5, %s3
  $region1: #{tpu_custom_call.1} parent=0
    #allocation2 [shape = 'u8[8192]{0}', space=vmem, size = 0x2000, scoped, tag = 'input window, operand 0, single buffered']
    #allocation3 [shape = 's32[1]{0}', space=sflag, size = 0x4, scoped, tag = 'scoped memory for tpu_custom_call.1']
    #allocation4 [shape = 's32[1]{0}', space=sflag, size = 0x4, scoped, tag = 'scoped memory for tpu_custom_call.1']
    #allocation5 [shape = 'u8[8192]{0}', space=vmem, size = 0x2000, scoped, tag = 'input window, operand 1, single buffered']
    #allocation6 [shape = 's32[1]{0}', space=sflag, size = 0x4, scoped, tag = 'scoped memory for tpu_custom_call.1']
    #allocation7 [shape = 'u8[8192]{0}', space=vmem, size = 0x2000, scoped, tag = 'output window, operand 0, single buffered']
    %7 = vsyncpa [#allocation3], 0
    %8 = vsyncpa [#allocation6], 0
    %9 = vsyncpa [#allocation4], 0
    // Predicated region
    $region2: #{tpu_custom_call.1} parent=1 // pred_check
      _
    $region3: #{tpu_custom_call.1} parent=1 // pred_check_branch
      %11 = sbr.rel (0) target = $region5
    $region4: #{tpu_custom_call.1} parent=1 // pred_region
      %s13 = ssub.s32 256, 256
      %14 = vsyncadd [#allocation3], %s13
      %s16 = sshll.u32 [#allocation2], 4
      %s17 = int_to_ptr.vmem [resolvable:$true] %s16
      %19 = dma.hbm_to_vmem [thread:$0]  %s0, 256, %s17, [#allocation3]
    $region5: #{tpu_custom_call.1} parent=1 // pred_fallthru
      _
    // Predicated region
    $region6: #{tpu_custom_call.1} parent=1 // pred_check
      _
    $region7: #{tpu_custom_call.1} parent=1 // pred_check_branch
      %21 = sbr.rel (0) target = $region9
    $region8: #{tpu_custom_call.1} parent=1 // pred_region
      %s23 = ssub.s32 256, 256
      %24 = vsyncadd [#allocation6], %s23
      %s26 = sshll.u32 [#allocation5], 4
      %s27 = int_to_ptr.vmem [resolvable:$true] %s26
      %29 = dma.hbm_to_vmem [thread:$0]  %s1, 256, %s27, [#allocation6]
    $region9: #{tpu_custom_call.1} parent=1 // pred_fallthru
      _
    // Predicated region
    $region10: #{tpu_custom_call.1} parent=1 // pred_check
      _
    $region11: #{tpu_custom_call.1} parent=1 // pred_check_branch
      %31 = sbr.rel (0) target = $region13
    $region12: #{tpu_custom_call.1} parent=1 // pred_region
      %32 = dma.done [#allocation3], 256
    $region13: #{tpu_custom_call.1} parent=1 // pred_fallthru
      _
    // Predicated region
    $region14: #{tpu_custom_call.1} parent=1 // pred_check
      _
    $region15: #{tpu_custom_call.1} parent=1 // pred_check_branch
      %34 = sbr.rel (0) target = $region17
    $region16: #{tpu_custom_call.1} parent=1 // pred_region
      %35 = dma.done [#allocation6], 256
    $region17: #{tpu_custom_call.1} parent=1 // pred_fallthru
      _
    %v36 = vld [vmem:[#allocation2] sm:$0xff]
    %v37 = vld [vmem:[#allocation2 + $0x8] sm:$0xff]
    %v38 = vld [vmem:[#allocation5] sm:$0xff]
    %v39 = vld [vmem:[#allocation5 + $0x8] sm:$0xff]
    %v40 = vsub.f32 %v36, %v38
    %v41 = vsub.f32 %v37, %v39
    %v42 = vmax.f32 %v40, -1.0
    %v43 = vmax.f32 %v41, -1.0
    %v44 = vmin.f32 %v42, 1.0
    %v45 = vmin.f32 %v43, 1.0
    %v46 = vsub.f32 %v36, %v44
    %v47 = vsub.f32 %v37, %v45
    %48 = vst [vmem:[#allocation7] sm:$0xff] %v46
    %49 = vst [vmem:[#allocation7 + $0x8] sm:$0xff] %v47
    // Predicated region
    $region18: #{tpu_custom_call.1} parent=1 // pred_check
      _
    $region19: #{tpu_custom_call.1} parent=1 // pred_check_branch
      %51 = sbr.rel (0) target = $region21
    $region20: #{tpu_custom_call.1} parent=1 // pred_region
      %s53 = ssub.s32 256, 256
      %54 = vsyncadd [#allocation4], %s53
      %s56 = sshll.u32 [#allocation7], 4
      %s57 = int_to_ptr.vmem [resolvable:$true] %s56
      %59 = dma.vmem_to_hbm [thread:$0]  %s57, 256, %s2, [#allocation4]
    $region21: #{tpu_custom_call.1} parent=1 // pred_fallthru
      _
    // Predicated region
    $region22: #{tpu_custom_call.1} parent=1 // pred_check
      _
    $region23: #{tpu_custom_call.1} parent=1 // pred_check_branch
      %61 = sbr.rel (0) target = $region25
    $region24: #{tpu_custom_call.1} parent=1 // pred_region
      %62 = dma.done [#allocation4], 256
    $region25: #{tpu_custom_call.1} parent=1 // pred_fallthru
      _
    %63 = vsyncpa [#allocation3], 1
    %64 = vsyncpa [#allocation6], 1
    %65 = vsyncpa [#allocation4], 1

</llo_original>
